<compile_context>
chip_gen: v6e
topology: v6e:2x2x1
jax: 0.10.0
libtpu: 0.0.40
codegen_flags: <defaults>
</compile_context>

<pallas_src>
import functools
import math

import jax
import jax.numpy as jnp
from jax.experimental import pallas as pl
from jax.experimental.pallas import tpu as pltpu

_LANE = 128
# 8192 rows x 128 lanes x 4 B = 4 MiB per f32 input block; 2 inputs x 2
# pipeline buffers = 16 MiB of streaming VMEM.  Multiple of 16 so bf16 inputs
# pack cleanly too.
_MAX_ROWS = 8192


def _pow_gamma(d, gamma):
    """|d|**gamma without the exp/log path for the common exponents."""
    if gamma == 1.5:
        return d * jnp.sqrt(d)     # EUP sqrt + VPU mul; exact at d == 0
    if gamma == 2.0:
        return d * d
    if gamma == 1.0:
        return d
    return jnp.power(d, gamma)     # forward-only; exp/log based


def _nrd_partial_kernel(pr_ref, gt_ref, out_ref, *, gamma, valid_rows_last,
                        mask_tail):
    """Per-tile partials: out[0,0,:] = per-lane inter, out[0,1,:] = per-lane union."""

    def compute_and_store(masked):
        logits = pr_ref[...].astype(jnp.float32)
        gt = gt_ref[...].astype(jnp.float32)
        # sigmoid(x) = 0.5*tanh(0.5*x) + 0.5 : one EUP op instead of
        # exp + reciprocal, keeping total transcendentals at 2/elem.
        pr = 0.5 * jnp.tanh(0.5 * logits) + 0.5

        if masked:
            # Only the last grid tile runs this branch (gated by pl.when):
            # zero out rows past the true row count.  Row-only mask -> one
            # iota + compare + two selects, and no int32 overflow risk since
            # valid_rows_last <= row_tile.
            rows, lanes = logits.shape
            row = jax.lax.broadcasted_iota(jnp.int32, (rows, lanes), 0)
            valid = row < valid_rows_last
            pr = jnp.where(valid, pr, 0.0)
            gt = jnp.where(valid, gt, 0.0)

        d_pow = _pow_gamma(jnp.abs(pr - gt), gamma)
        # Row-wise (sublane-axis) reductions only -> mostly VPU vreg adds; the
        # final cross-lane / cross-tile reduction happens once in the wrapper.
        out_ref[0, 0, :] = jnp.sum(d_pow, axis=0)             # (128,)
        out_ref[0, 1, :] = jnp.sum(gt * gt + pr * pr, axis=0)  # (128,)

    if mask_tail:
        is_last = pl.program_id(0) == pl.num_programs(0) - 1

        @pl.when(jnp.logical_not(is_last))
        def _():
            compute_and_store(masked=False)

        @pl.when(is_last)
        def _():
            compute_and_store(masked=True)
    else:
        compute_and_store(masked=False)


def noise_robust_dice_loss(y_pr, y_gt, *, eps=1.0, gamma=1.5,
                           max_rows=_MAX_ROWS, stream_dtype=None):
    """Pallas implementation of NoiseRobustDiceLoss().forward(y_pr, y_gt)."""
    # TODO(synk): ignore_channels / threshold options of the reference module
    # (both None in the default config) are not implemented in the kernel.
    assert y_pr.shape == y_gt.shape
    n = math.prod(y_pr.shape)

    pr_flat = jnp.ravel(y_pr)   # keep native dtype; widen inside the kernel
    gt_flat = jnp.ravel(y_gt)
    if stream_dtype is not None:
        # Optional: halve HBM traffic (e.g. bf16 streaming). Changes numerics
        # slightly; off by default to match the f32 reference exactly.
        pr_flat = pr_flat.astype(stream_dtype)
        gt_flat = gt_flat.astype(stream_dtype)

    n_main = (n // _LANE) * _LANE
    rem = n - n_main

    if rem:
        # <=127-element remainder computed with plain jnp (avoids padding a
        # full copy of both tensors just to make the (m,128) view legal).
        pr_t = jax.nn.sigmoid(pr_flat[n_main:].astype(jnp.float32))
        gt_t = gt_flat[n_main:].astype(jnp.float32)
        inter_tail = jnp.sum(_pow_gamma(jnp.abs(pr_t - gt_t), gamma))
        union_tail = jnp.sum(gt_t * gt_t + pr_t * pr_t)
        pr_flat = pr_flat[:n_main]
        gt_flat = gt_flat[:n_main]
    else:
        inter_tail = jnp.float32(0.0)
        union_tail = jnp.float32(0.0)

    m = n_main // _LANE
    if m == 0:
        # Tensor smaller than one lane row: nothing for the kernel to do.
        return inter_tail / (union_tail + eps)

    row_tile = min(max_rows, m)
    # Give v7x's two TensorCores something to shard: prefer >= 2 tiles when
    # the whole slab would otherwise be a single tile, keeping row_tile a
    # multiple of 8 sublanes (required when row_tile != m).
    if row_tile == m and m >= 16:
        row_tile = ((m + 1) // 2 + 7) // 8 * 8
    num_tiles = pl.cdiv(m, row_tile)
    valid_rows_last = m - (num_tiles - 1) * row_tile
    mask_tail = valid_rows_last != row_tile

    pr2d = pr_flat.reshape(m, _LANE)
    gt2d = gt_flat.reshape(m, _LANE)

    kernel = functools.partial(
        _nrd_partial_kernel, gamma=gamma,
        valid_rows_last=valid_rows_last, mask_tail=mask_tail)

    # 2 inputs x 2 pipeline buffers x block, plus headroom for the tiny output
    # blocks / internal scratch.  Explicit so v5e's 16 MiB scoped default does
    # not reject the 4 MiB blocks; stays well under v7x's 64 MiB physical VMEM.
    block_bytes = row_tile * _LANE * pr2d.dtype.itemsize
    vmem_limit = int(min(4 * block_bytes + (8 << 20), 48 << 20))

    partials = pl.pallas_call(
        kernel,
        out_shape=jax.ShapeDtypeStruct((num_tiles, 2, _LANE), jnp.float32),
        grid_spec=pltpu.PrefetchScalarGridSpec(
            num_scalar_prefetch=0,
            grid=(num_tiles,),
            in_specs=[
                pl.BlockSpec((row_tile, _LANE), lambda i: (i, 0)),
                pl.BlockSpec((row_tile, _LANE), lambda i: (i, 0)),
            ],
            out_specs=pl.BlockSpec((1, 2, _LANE), lambda i: (i, 0, 0)),
        ),
        compiler_params=pltpu.CompilerParams(
            # Each grid step writes its own output block -> truly parallel;
            # shards across both TensorCores on v7x, harmless on v5e/v6e.
            dimension_semantics=("parallel",),
            vmem_limit_bytes=vmem_limit,
        ),
    )(pr2d, gt2d)

    inter = jnp.sum(partials[:, 0, :]) + inter_tail
    union = jnp.sum(partials[:, 1, :]) + union_tail + eps
    return inter / union


def _reference(y_pr, y_gt, *, eps=1.0, gamma=1.5):
    pr = jax.nn.sigmoid(y_pr.astype(jnp.float32))
    gt = y_gt.astype(jnp.float32)
    inter = jnp.sum(jnp.abs(pr - gt) ** gamma)
    union = jnp.sum(gt * gt) + jnp.sum(pr * pr) + eps
    return inter / union


if __name__ == "__main__":
    key = jax.random.PRNGKey(0)
    k1, k2, k3, k4 = jax.random.split(key, 4)

    # Main test: NCHW, matching PyTorch conventions (numel % 128 == 0).
    # m = 16 rows -> auto-split into 2 tiles (exercises the parallel grid).
    y_pr = jax.random.normal(k1, (2, 4, 16, 16), dtype=jnp.float32)
    y_gt = (jax.random.uniform(k2, (2, 4, 16, 16)) > 0.5).astype(jnp.float32)
    loss = jax.block_until_ready(noise_robust_dice_loss(y_pr, y_gt, eps=1.0, gamma=1.5))
    ref = jax.block_until_ready(_reference(y_pr, y_gt, eps=1.0, gamma=1.5))
    assert jnp.allclose(loss, ref, rtol=1e-5, atol=1e-6), (loss, ref)

    # Ragged test: numel not a multiple of 128 -> lane-aligned prefix goes to
    # the kernel, the <=127-element remainder is combined in the wrapper.
    y_pr2 = jax.random.normal(k3, (2, 3, 7, 9), dtype=jnp.float32)
    y_gt2 = (jax.random.uniform(k4, (2, 3, 7, 9)) > 0.5).astype(jnp.float32)
    loss2 = jax.block_until_ready(noise_robust_dice_loss(y_pr2, y_gt2))
    ref2 = jax.block_until_ready(_reference(y_pr2, y_gt2))
    assert jnp.allclose(loss2, ref2, rtol=1e-5, atol=1e-6), (loss2, ref2)

    # Partial-last-block test (default tiling): m = 17 rows -> 2 tiles of 16,
    # last tile has 1 valid row -> exercises the pl.when-gated masked branch.
    y_pr3 = jax.random.normal(k1, (2, 4, 16, 17), dtype=jnp.float32)
    y_gt3 = (jax.random.uniform(k2, (2, 4, 16, 17)) > 0.5).astype(jnp.float32)
    loss3 = jax.block_until_ready(noise_robust_dice_loss(y_pr3, y_gt3))
    ref3 = jax.block_until_ready(_reference(y_pr3, y_gt3))
    assert jnp.allclose(loss3, ref3, rtol=1e-5, atol=1e-6), (loss3, ref3)

    # Multi-tile test: small forced row tile -> 3 tiles with a partial last
    # block (lean interior path + masked last tile).
    loss4 = jax.block_until_ready(noise_robust_dice_loss(y_pr3, y_gt3, max_rows=8))
    assert jnp.allclose(loss4, ref3, rtol=1e-5, atol=1e-6), (loss4, ref3)

    print("KERNEL_OK")
</pallas_src>

<mosaic_0001>
module attributes {stable_mosaic.version = 11 : i64} {
  func.func @_nrd_partial_kernel(%arg0: i32, %arg1: memref<8x128xf32, #tpu.memory_space<vmem>>, %arg2: memref<8x128xf32, #tpu.memory_space<vmem>>, %arg3: memref<1x2x128xf32, #tpu.memory_space<vmem>>) attributes {dimension_semantics = [#tpu.dimension_semantics<parallel>], iteration_bounds = array<i64: 2>, scalar_prefetch = 0 : i64, scratch_operands = 0 : i64, tpu.core_type = #tpu.core_type<tc>, window_params = [{transform_indices = @transform_0, window_bounds = array<i64: 8, 128>}, {transform_indices = @transform_1, window_bounds = array<i64: 8, 128>}, {transform_indices = @transform_2, window_bounds = array<i64: 1, 2, 128>}]} {
    %c0 = arith.constant 0 : index
    %c0_0 = arith.constant 0 : index
    %0 = vector.load %arg1[%c0, %c0_0] : memref<8x128xf32, #tpu.memory_space<vmem>>, vector<8x128xf32>
    %c0_1 = arith.constant 0 : index
    %c0_2 = arith.constant 0 : index
    %1 = vector.load %arg2[%c0_1, %c0_2] : memref<8x128xf32, #tpu.memory_space<vmem>>, vector<8x128xf32>
    %cst = arith.constant 5.000000e-01 : f32
    %2 = vector.broadcast %cst : f32 to vector<8x128xf32>
    %3 = arith.mulf %2, %0 : vector<8x128xf32>
    %4 = math.tanh %3 : vector<8x128xf32>
    %cst_3 = arith.constant 5.000000e-01 : f32
    %5 = vector.broadcast %cst_3 : f32 to vector<8x128xf32>
    %6 = arith.mulf %5, %4 : vector<8x128xf32>
    %cst_4 = arith.constant 5.000000e-01 : f32
    %7 = vector.broadcast %cst_4 : f32 to vector<8x128xf32>
    %8 = arith.addf %6, %7 : vector<8x128xf32>
    %9 = arith.subf %8, %1 : vector<8x128xf32>
    %10 = math.absf %9 : vector<8x128xf32>
    %11 = math.sqrt %10 : vector<8x128xf32>
    %12 = arith.mulf %10, %11 : vector<8x128xf32>
    %cst_5 = arith.constant dense<0.000000e+00> : vector<128xf32>
    %13 = vector.multi_reduction <add>, %12, %cst_5 [0] : vector<8x128xf32> to vector<128xf32>
    %c0_6 = arith.constant 0 : index
    %c0_7 = arith.constant 0 : index
    %c0_8 = arith.constant 0 : index
    %14 = vector.load %arg3[%c0_6, %c0_7, %c0_8] : memref<1x2x128xf32, #tpu.memory_space<vmem>>, vector<1x1x128xf32>
    %15 = vector.shape_cast %14 : vector<1x1x128xf32> to vector<128xf32>
    %16 = vector.shape_cast %13 : vector<128xf32> to vector<1x1x128xf32>
    tpu.vector_store %arg3[%c0_6, %c0_7, %c0_8], %16 {strides = array<i32>} : memref<1x2x128xf32, #tpu.memory_space<vmem>>, vector<1x1x128xf32>,
    %17 = arith.mulf %1, %1 : vector<8x128xf32>
    %18 = arith.mulf %8, %8 : vector<8x128xf32>
    %19 = arith.addf %17, %18 : vector<8x128xf32>
    %cst_9 = arith.constant dense<0.000000e+00> : vector<128xf32>
    %20 = vector.multi_reduction <add>, %19, %cst_9 [0] : vector<8x128xf32> to vector<128xf32>
    %c0_10 = arith.constant 0 : index
    %c1 = arith.constant 1 : index
    %c0_11 = arith.constant 0 : index
    %21 = vector.load %arg3[%c0_10, %c1, %c0_11] : memref<1x2x128xf32, #tpu.memory_space<vmem>>, vector<1x1x128xf32>
    %22 = vector.shape_cast %21 : vector<1x1x128xf32> to vector<128xf32>
    %23 = vector.shape_cast %20 : vector<128xf32> to vector<1x1x128xf32>
    tpu.vector_store %arg3[%c0_10, %c1, %c0_11], %23 {strides = array<i32>} : memref<1x2x128xf32, #tpu.memory_space<vmem>>, vector<1x1x128xf32>,
    return
  }
  func.func @transform_0(%arg0: i32) -> (i32, i32) {
    %c0_i32 = arith.constant 0 : i32
    %c0_i32_0 = arith.constant 0 : i32
    return %arg0, %c0_i32 : i32, i32
  }
  func.func @transform_1(%arg0: i32) -> (i32, i32) {
    %c0_i32 = arith.constant 0 : i32
    %c0_i32_0 = arith.constant 0 : i32
    return %arg0, %c0_i32 : i32, i32
  }
  func.func @transform_2(%arg0: i32) -> (i32, i32, i32) {
    %c0_i32 = arith.constant 0 : i32
    %c0_i32_0 = arith.constant 0 : i32
    %c0_i32_1 = arith.constant 0 : i32
    return %arg0, %c0_i32, %c0_i32_0 : i32, i32, i32
  }
}

</mosaic_0001>

<llo_original>
// kernel: tpu_custom_call.1
$region0: #{tpu_custom_call.1}
  #allocation0 [shape = 'u32[]', space=smem, size = 0x4, offset = 0x4, fixed_abs, tag = 'smem constant byte address 0x4 - core index']
  #allocation1 [shape = 'u32[144,128]{1,0:T(1,128)}', space=vmem, size = 0x12000, scoped, tag = 'internal scratch']
  %s0 = inlined_call_operand.hbm [shape: f32[16,128], index: 0, kind: input, shape index: {}]
  %s1 = inlined_call_operand.hbm [shape: f32[16,128], index: 1, kind: input, shape index: {}]
  %s2 = inlined_call_operand.hbm [shape: f32[2,2,128], index: 2, kind: output, shape index: {}]
  %s3 = sld [smem:[#allocation0]]
  $region49: #{tpu_custom_call.1} parent=0
    _
  %s5 = ssub.s32 1, %s3
  %s6 = scalar_select 0, %s5, %s3
  $region1: #{tpu_custom_call.1} parent=0
    #allocation2 [shape = 'u8[8192]{0}', space=vmem, size = 0x2000, scoped, tag = 'input window, operand 0']
    #allocation3 [shape = 's32[2]{0}', space=sflag, size = 0x8, scoped, tag = 'scoped memory for tpu_custom_call.1']
    #allocation4 [shape = 's32[2]{0}', space=sflag, size = 0x8, scoped, tag = 'scoped memory for tpu_custom_call.1']
    #allocation5 [shape = 'u8[8192]{0}', space=vmem, size = 0x2000, scoped, tag = 'input window, operand 1']
    #allocation6 [shape = 's32[2]{0}', space=sflag, size = 0x8, scoped, tag = 'scoped memory for tpu_custom_call.1']
    #allocation7 [shape = 'u8[2048]{0}', space=vmem, size = 0x800, scoped, tag = 'output window, operand 0']
    %7 = vsyncpa [#allocation3], 0
    %s8 = scalar_lea.sflag [#allocation3], 1
    %9 = vsyncpa %s8, 0
    %10 = vsyncpa [#allocation6], 0
    %s11 = scalar_lea.sflag [#allocation6], 1
    %12 = vsyncpa %s11, 0
    %13 = vsyncpa [#allocation4], 0
    %s14 = scalar_lea.sflag [#allocation4], 1
    %15 = vsyncpa %s14, 0
    loop: start=0, step=1, limit=4
    $region2: #{tpu_custom_call.1} parent=1 // loop_pre_header
      _
    $region3: #{tpu_custom_call.1} parent=1 // loop_header
      %s17 = sphi 0, %s21
      %p18 = scmp.ge.s32.totalorder %s17, 4
      %s27 = sphi 0, %s29
      %s30 = sphi 0, %s27
      %s31 = sphi 0, %s30
      %s47 = sphi 0, %s31
      %s53 = sphi 0, %s55
      %s56 = sphi 0, %s53
      %s57 = sphi 0, %s56
      %s73 = sphi 0, %s57
      %s79 = sphi 0, %s81
      %s82 = sphi 0, %s79
      %s83 = sphi 0, %s82
      %s99 = sphi 0, %s83
    $region4: #{tpu_custom_call.1} parent=1 // loop_header_branch
      %20 = sbr.rel (%p18) target = $region8
    $region5: #{tpu_custom_call.1} parent=1 // loop_body
      %s22 = ssub.s32 %s17, 1
      %s23 = ssub.s32 %s17, 2
      %s24 = sadd.s32 %s17, 1
      %s25 = ssub.s32 %s17, %s24
      %p26 = scmp.eq.s32.totalorder %s25, 0
      %s28 = sadd.s32 %s27, 1
      %s29 = scalar_select %p26, %s27, %s28
      %p32 = pneg %p26
      %p33 = scmp.eq.s32.totalorder %s17, 1
      %p34 = por %p32, %p33
      %p35 = scmp.ne.s32.totalorder %s27, %s30
      %p36 = scmp.eq.s32.totalorder %s17, 0
      %p37 = por %p35, %p36
      %p38 = scmp.ne.s32.totalorder %s27, %s30
      %p39 = scmp.eq.s32.totalorder %s22, 1
      %p40 = por %p38, %p39
      %p41 = scmp.ne.s32.totalorder %s30, %s31
      %p42 = scmp.eq.s32.totalorder %s22, 0
      %p43 = por %p41, %p42
      %p44 = scmp.ne.s32.totalorder %s30, %s31
      %p45 = scmp.eq.s32.totalorder %s23, 1
      %p46 = por %p44, %p45
      %p48 = scmp.ne.s32.totalorder %s31, %s47
      %p49 = scmp.eq.s32.totalorder %s23, 0
      %p50 = por %p48, %p49
      %s51 = ssub.s32 %s17, %s24
      %p52 = scmp.eq.s32.totalorder %s51, 0
      %s54 = sadd.s32 %s53, 1
      %s55 = scalar_select %p52, %s53, %s54
      %p58 = pneg %p52
      %p59 = scmp.eq.s32.totalorder %s17, 1
      %p60 = por %p58, %p59
      %p61 = scmp.ne.s32.totalorder %s53, %s56
      %p62 = scmp.eq.s32.totalorder %s17, 0
      %p63 = por %p61, %p62
      %p64 = scmp.ne.s32.totalorder %s53, %s56
      %p65 = scmp.eq.s32.totalorder %s22, 1
      %p66 = por %p64, %p65
      %p67 = scmp.ne.s32.totalorder %s56, %s57
      %p68 = scmp.eq.s32.totalorder %s22, 0
      %p69 = por %p67, %p68
      %p70 = scmp.ne.s32.totalorder %s56, %s57
      %p71 = scmp.eq.s32.totalorder %s23, 1
      %p72 = por %p70, %p71
      %p74 = scmp.ne.s32.totalorder %s57, %s73
      %p75 = scmp.eq.s32.totalorder %s23, 0
      %p76 = por %p74, %p75
      %s77 = ssub.s32 %s17, %s24
      %p78 = scmp.eq.s32.totalorder %s77, 0
      %s80 = sadd.s32 %s79, 1
      %s81 = scalar_select %p78, %s79, %s80
      %p84 = pneg %p78
      %p85 = scmp.eq.s32.totalorder %s17, 1
      %p86 = por %p84, %p85
      %p87 = scmp.ne.s32.totalorder %s79, %s82
      %p88 = scmp.eq.s32.totalorder %s17, 0
      %p89 = por %p87, %p88
      %p90 = scmp.ne.s32.totalorder %s79, %s82
      %p91 = scmp.eq.s32.totalorder %s22, 1
      %p92 = por %p90, %p91
      %p93 = scmp.ne.s32.totalorder %s82, %s83
      %p94 = scmp.eq.s32.totalorder %s22, 0
      %p95 = por %p93, %p94
      %p96 = scmp.ne.s32.totalorder %s82, %s83
      %p97 = scmp.eq.s32.totalorder %s23, 1
      %p98 = por %p96, %p97
      %p100 = scmp.ne.s32.totalorder %s83, %s99
      %p101 = scmp.eq.s32.totalorder %s23, 0
      %p102 = por %p100, %p101
      %p103 = scmp.le.s32.totalorder 1, %s17
      %p104 = scmp.lt.s32.totalorder %s17, 3
      %p105 = pnand %p103, %p104
      %p106 = pneg %p105
      // Predicated region
      $region9: #{tpu_custom_call.1} parent=5 // pred_check
        _
      $region10: #{tpu_custom_call.1} parent=5 // pred_check_branch
        %108 = sbr.rel (%p105) target = $region12
      $region11: #{tpu_custom_call.1} parent=5 // pred_region
        %s109 = ssub.s32 %s17, 1
      $region12: #{tpu_custom_call.1} parent=5 // pred_fallthru
        _
      %p110 = scmp.lt.s32.totalorder %s17, 2
      // Predicated region
      $region13: #{tpu_custom_call.1} parent=5 // pred_check
        %p111 = pneg %p110
      $region14: #{tpu_custom_call.1} parent=5 // pred_check_branch
        %113 = sbr.rel (%p111) target = $region16
      $region15: #{tpu_custom_call.1} parent=5 // pred_region
        // Predicated region
        $region17: #{tpu_custom_call.1} parent=15 // pred_check
          %p114 = pneg %p37
        $region18: #{tpu_custom_call.1} parent=15 // pred_check_branch
          %116 = sbr.rel (%p114) target = $region20
        $region19: #{tpu_custom_call.1} parent=15 // pred_region
          %s117 = sand.u32 %s27, 1
          %s118 = scalar_lea.sflag [#allocation3], %s117
          %s119 = sand.u32 %s27, 1
          %s120 = smul.addr %s119, 8
          %s121 = scalar_lea.vmem [#allocation2], %s120
          %s123 = ssub.s32 128, 128
          %124 = vsyncadd %s118, %s123
          %s125 = smul.addr %s17, 128
          %s126 = scalar_lea.hbm %s0, %s125
          %s128 = sshll.u32 %s121, 4
          %s129 = int_to_ptr.vmem [resolvable:$true] %s128
          %131 = dma.hbm_to_vmem [thread:$0]  %s126, 128, %s129, %s118
        $region20: #{tpu_custom_call.1} parent=15 // pred_fallthru
          _
        // Predicated region
        $region21: #{tpu_custom_call.1} parent=15 // pred_check
          %p132 = pneg %p63
        $region22: #{tpu_custom_call.1} parent=15 // pred_check_branch
          %134 = sbr.rel (%p132) target = $region24
        $region23: #{tpu_custom_call.1} parent=15 // pred_region
          %s135 = sand.u32 %s53, 1
          %s136 = scalar_lea.sflag [#allocation6], %s135
          %s137 = sand.u32 %s53, 1
          %s138 = smul.addr %s137, 8
          %s139 = scalar_lea.vmem [#allocation5], %s138
          %s141 = ssub.s32 128, 128
          %142 = vsyncadd %s136, %s141
          %s143 = smul.addr %s17, 128
          %s144 = scalar_lea.hbm %s1, %s143
          %s146 = sshll.u32 %s139, 4
          %s147 = int_to_ptr.vmem [resolvable:$true] %s146
          %149 = dma.hbm_to_vmem [thread:$0]  %s144, 128, %s147, %s136
        $region24: #{tpu_custom_call.1} parent=15 // pred_fallthru
          _
      $region16: #{tpu_custom_call.1} parent=5 // pred_fallthru
        _
      %p150 = scmp.le.s32.totalorder 1, %s17
      %p151 = scmp.lt.s32.totalorder %s17, 3
      %p152 = pnand %p150, %p151
      %p153 = pneg %p152
      // Predicated region
      $region25: #{tpu_custom_call.1} parent=5 // pred_check
        _
      $region26: #{tpu_custom_call.1} parent=5 // pred_check_branch
        %155 = sbr.rel (%p152) target = $region28
      $region27: #{tpu_custom_call.1} parent=5 // pred_region
        %s156 = ssub.s32 %s17, 1
        %s157 = sand.u32 %s30, 1
        %s158 = scalar_lea.sflag [#allocation3], %s157
        %s159 = sand.u32 %s30, 1
        %s160 = smul.addr %s159, 8
        %s161 = scalar_lea.vmem [#allocation2], %s160
        // Predicated region
        $region29: #{tpu_custom_call.1} parent=27 // pred_check
          %p162 = pneg %p43
        $region30: #{tpu_custom_call.1} parent=27 // pred_check_branch
          %164 = sbr.rel (%p162) target = $region32
        $region31: #{tpu_custom_call.1} parent=27 // pred_region
          %165 = dma.done %s158, 128
        $region32: #{tpu_custom_call.1} parent=27 // pred_fallthru
          _
        %s166 = sand.u32 %s56, 1
        %s167 = scalar_lea.sflag [#allocation6], %s166
        %s168 = sand.u32 %s56, 1
        %s169 = smul.addr %s168, 8
        %s170 = scalar_lea.vmem [#allocation5], %s169
        // Predicated region
        $region33: #{tpu_custom_call.1} parent=27 // pred_check
          %p171 = pneg %p69
        $region34: #{tpu_custom_call.1} parent=27 // pred_check_branch
          %173 = sbr.rel (%p171) target = $region36
        $region35: #{tpu_custom_call.1} parent=27 // pred_region
          %174 = dma.done %s167, 128
        $region36: #{tpu_custom_call.1} parent=27 // pred_fallthru
          _
        %s175 = sand.u32 %s30, 1
        %s176 = scalar_lea.sflag [#allocation3], %s175
        %s177 = sand.u32 %s30, 1
        %s178 = smul.addr %s177, 8
        %s179 = scalar_lea.vmem [#allocation2], %s178
        %p180 = pneg %p43
        %p181 = pneg %p40
        %s182 = sand.u32 %s56, 1
        %s183 = scalar_lea.sflag [#allocation6], %s182
        %s184 = sand.u32 %s56, 1
        %s185 = smul.addr %s184, 8
        %s186 = scalar_lea.vmem [#allocation5], %s185
        %p187 = pneg %p69
        %p188 = pneg %p66
        %p189 = pneg %p95
        %p190 = pneg %p92
        %s191 = sand.u32 %s82, 1
        %s192 = scalar_lea.sflag [#allocation4], %s191
        %s193 = sand.u32 %s82, 1
        %s194 = smul.addr %s193, 2
        %s195 = scalar_lea.vmem [#allocation7], %s194
        %v196 = vld [vmem:[%s161] sm:$0xff]
        %v197 = vld [vmem:[%s170] sm:$0xff]
        %v198 = vmul.f32 %v196, 0.5
        %v199 = vtanh.pop %v198
        %v200 = vmul.f32 %v199, 0.5
        %v201 = vadd.f32 %v200, 0.5
        %v202 = vsub.f32 %v201, %v197
        %v203 = vand.u32 2147483647, %v202
        %v204 = vrsqrt.pop %v203
        %v205 = vmul.f32 %v203, %v204
        %vm206 = vcmp.eq.f32.partialorder %v203, inf
        %v207 = vsel %vm206, %v203, %v205
        %vm208 = vcmp.eq.f32.partialorder %v203, 0.0
        %v209 = vand.u32 %v203, 2147483648
        %v210 = vsel %vm208, %v209, %v207
        %v211 = vmul.f32 %v203, %v210
        %v212 = vrot.slane %v211, 4
        %v213 = vadd.f32 %v211, %v212
        %v214 = vrot.slane %v213, 2
        %v215 = vadd.f32 %v213, %v214
        %v216 = vrot.slane %v215, 1
        %v217 = vadd.f32 %v215, %v216
        %218 = vst [vmem:[%s195] sm:$0x1] %v217
        %v219 = vmul.f32 %v197, %v197
        %v220 = vmul.f32 %v201, %v201
        %v221 = vadd.f32 %v219, %v220
        %v222 = vrot.slane %v221, 4
        %v223 = vadd.f32 %v221, %v222
        %v224 = vrot.slane %v223, 2
        %v225 = vadd.f32 %v223, %v224
        %v226 = vrot.slane %v225, 1
        %v227 = vadd.f32 %v225, %v226
        %228 = vst [vmem:[%s195 + $0x1] sm:$0x1] %v227
        %s229 = sand.u32 %s82, 1
        %s230 = scalar_lea.sflag [#allocation4], %s229
        %s231 = sand.u32 %s82, 1
        %s232 = smul.addr %s231, 2
        %s233 = scalar_lea.vmem [#allocation7], %s232
        // Predicated region
        $region37: #{tpu_custom_call.1} parent=27 // pred_check
          %p234 = pneg %p92
        $region38: #{tpu_custom_call.1} parent=27 // pred_check_branch
          %236 = sbr.rel (%p234) target = $region40
        $region39: #{tpu_custom_call.1} parent=27 // pred_region
          %s238 = ssub.s32 32, 32
          %239 = vsyncadd %s230, %s238
          %s240 = smul.addr %s22, 32
          %s241 = scalar_lea.hbm %s2, %s240
          %s243 = sshll.u32 %s233, 4
          %s244 = int_to_ptr.vmem [resolvable:$true] %s243
          %246 = dma.vmem_to_hbm [thread:$0]  %s244, 32, %s241, %s230
        $region40: #{tpu_custom_call.1} parent=27 // pred_fallthru
          _
      $region28: #{tpu_custom_call.1} parent=5 // pred_fallthru
        _
      %p247 = scmp.le.s32.totalorder 2, %s17
      // Predicated region
      $region41: #{tpu_custom_call.1} parent=5 // pred_check
        %p248 = pneg %p247
      $region42: #{tpu_custom_call.1} parent=5 // pred_check_branch
        %250 = sbr.rel (%p248) target = $region44
      $region43: #{tpu_custom_call.1} parent=5 // pred_region
        %s251 = ssub.s32 %s17, 2
        // Predicated region
        $region45: #{tpu_custom_call.1} parent=43 // pred_check
          %p252 = pneg %p98
        $region46: #{tpu_custom_call.1} parent=43 // pred_check_branch
          %254 = sbr.rel (%p252) target = $region48
        $region47: #{tpu_custom_call.1} parent=43 // pred_region
          %s255 = sand.u32 %s83, 1
          %s256 = scalar_lea.sflag [#allocation4], %s255
          %s257 = sand.u32 %s83, 1
          %s258 = smul.addr %s257, 2
          %s259 = scalar_lea.vmem [#allocation7], %s258
          %260 = dma.done %s256, 32
        $region48: #{tpu_custom_call.1} parent=43 // pred_fallthru
          _
      $region44: #{tpu_custom_call.1} parent=5 // pred_fallthru
        _
    $region6: #{tpu_custom_call.1} parent=1 // loop_footer
      %s21 = sadd.s32 1, %s17
    $region7: #{tpu_custom_call.1} parent=1 // loop_footer_branch
      %16 = sbr.rel target = $region3
    $region8: #{tpu_custom_call.1} parent=1 // loop_exit
      _
    %261 = vsyncpa [#allocation3], 1
    %s262 = scalar_lea.sflag [#allocation3], 1
    %263 = vsyncpa %s262, 1
    %264 = vsyncpa [#allocation6], 1
    %s265 = scalar_lea.sflag [#allocation6], 1
    %266 = vsyncpa %s265, 1
    %267 = vsyncpa [#allocation4], 1
    %s268 = scalar_lea.sflag [#allocation4], 1
    %269 = vsyncpa %s268, 1

</llo_original>
